<compile_context>
chip_gen: v5e
topology: v5e:2x2
jax: 0.10.0
libtpu: 0.0.40
codegen_flags: <defaults>
</compile_context>

<pallas_src>
import functools
import math
import warnings

import jax
import jax.numpy as jnp
from jax.experimental import pallas as pl
from jax.experimental.pallas import tpu as pltpu

# Donation is a best-effort optimization; when the wrapper has to pad, the
# donated buffer may be unusable and JAX emits a harmless warning.
warnings.filterwarnings("ignore", message=".*donat.*")

_SUBLANE = 8


def _ema_kernel(scalars_ref, hidden_ref, value_ref, new_hidden_ref, avg_ref):
    """Elementwise EMA update on one (block_rows, lane) block.

    scalars_ref (SMEM, scalar prefetch) holds:
        [0] = 1 - decay
        [1] = 1 / (1 - decay ** counter)   (bias-correction factor)
    """
    one_minus_decay = scalars_ref[0]
    inv_bias_corr = scalars_ref[1]

    # Compute in f32 regardless of buffer dtype; cast explicitly on store.
    h = hidden_ref[...].astype(jnp.float32)
    v = value_ref[...].astype(jnp.float32)

    new_h = h - (h - v) * one_minus_decay
    new_hidden_ref[...] = new_h.astype(new_hidden_ref.dtype)
    avg_ref[...] = (new_h * inv_bias_corr).astype(avg_ref.dtype)


def _round_up(x, m):
    return ((x + m - 1) // m) * m


def _device_tuning():
    """(target_block_bytes_per_stream, vmem_limit_bytes) per TPU generation."""
    try:
        kind = jax.devices()[0].device_kind.lower()
    except Exception:  # pragma: no cover - defensive; default tuning is safe.
        kind = ""
    if "v7" in kind:
        # v7x: ~3.2 TB/s HBM, 64 MiB physical VMEM/TC -> bigger blocks.
        return 4 << 20, 48 << 20
    if "v5e" in kind or "v5 lite" in kind or "v5lite" in kind:
        # v5e: 16 MiB default scoped VMEM -> smaller blocks + explicit limit.
        return 1 << 20, 32 << 20
    # v6e / unknown.
    return 2 << 20, 32 << 20


def _choose_layout(total, itemsize, target_block_bytes):
    """Pick (lane, rows_padded, block_rows, num_blocks) for a flat array.

    Every shape maps onto a whole number of (block_rows, lane) tiles; the
    wrapper pads the flattened array up to rows_padded * lane elements.
    Blocks are balanced so padding never exceeds (8 * num_blocks - 1) rows.
    """
    if total >= 8 * 1024:
        lane = 1024
    elif total >= 8 * 512:
        lane = 512
    else:
        lane = 128
    rows = -(-total // lane)  # cdiv

    # Largest multiple-of-8 row count keeping a per-stream block <= target.
    max_block_rows = max(
        _SUBLANE, (target_block_bytes // (lane * itemsize)) // _SUBLANE * _SUBLANE
    )
    num_blocks = max(1, -(-rows // max_block_rows))          # cdiv
    block_rows = _round_up(-(-rows // num_blocks), _SUBLANE)  # balanced blocks
    rows_padded = block_rows * num_blocks
    return lane, rows_padded, block_rows, num_blocks


@functools.partial(jax.jit, donate_argnums=(0,))
def _ema_step(hidden, value, scalars):
    """One fused EMA step: returns (new_hidden, average), both hidden.shape."""
    orig_shape = hidden.shape
    total = math.prod(orig_shape) if orig_shape else 1
    itemsize = jnp.dtype(hidden.dtype).itemsize

    target_block_bytes, vmem_limit = _device_tuning()
    lane, rows_padded, block_rows, num_blocks = _choose_layout(
        total, itemsize, target_block_bytes
    )
    padded_total = rows_padded * lane

    h_flat = hidden.reshape(-1)
    v_flat = value.reshape(-1)
    if padded_total != total:
        pad = padded_total - total
        h_flat = jnp.pad(h_flat, (0, pad))
        v_flat = jnp.pad(v_flat, (0, pad))
    h2 = h_flat.reshape(rows_padded, lane)
    v2 = v_flat.reshape(rows_padded, lane)

    spec = pl.BlockSpec((block_rows, lane), lambda i, s: (i, 0))
    grid_spec = pltpu.PrefetchScalarGridSpec(
        num_scalar_prefetch=1,
        grid=(num_blocks,),
        in_specs=[spec, spec],
        out_specs=[spec, spec],
    )

    new_hidden, average = pl.pallas_call(
        _ema_kernel,
        grid_spec=grid_spec,
        out_shape=[
            jax.ShapeDtypeStruct((rows_padded, lane), hidden.dtype),
            jax.ShapeDtypeStruct((rows_padded, lane), hidden.dtype),
        ],
        # Alias hidden (call-arg index 1; index 0 is the scalar-prefetch arg)
        # onto output 0 (new_hidden): the buffer update is in-place in HBM.
        input_output_aliases={1: 0},
        compiler_params=pltpu.CompilerParams(
            dimension_semantics=("parallel",),
            vmem_limit_bytes=vmem_limit,
        ),
    )(scalars, h2, v2)

    new_hidden = new_hidden.reshape(-1)[:total].reshape(orig_shape)
    average = average.reshape(-1)[:total].reshape(orig_shape)
    return new_hidden, average


class ExponentialMovingAverage:
    """JAX/Pallas port of the PyTorch ExponentialMovingAverage module."""

    def __init__(self, init_value, decay):
        self.decay = float(decay)
        self.counter = 0
        # register_buffer('hidden', torch.zeros_like(init_value))
        self.hidden = jnp.zeros_like(init_value)

    def __call__(self, value):
        self.counter += 1
        one_minus_decay = 1.0 - self.decay
        inv_bias_corr = 1.0 / (1.0 - self.decay ** self.counter)
        scalars = jnp.array([one_minus_decay, inv_bias_corr], dtype=jnp.float32)
        # TODO(synk): in a full VQ codebook update, batch the cluster_size and
        # embed_avg EMAs into one pallas_call to amortize the launch cost.
        new_hidden, average = _ema_step(self.hidden, value, scalars)
        self.hidden = new_hidden
        return average


if __name__ == "__main__":
    key = jax.random.PRNGKey(0)

    # Codebook-like shape: N codes of dimension D.
    N, D = 32, 128
    decay = 0.99

    init_value = jnp.zeros((N, D), dtype=jnp.float32)
    ema = ExponentialMovingAverage(init_value, decay)

    # Two forward steps with deterministic inputs.
    k1, k2, k3 = jax.random.split(key, 3)
    v1 = jax.random.normal(k1, (N, D), dtype=jnp.float32)
    v2 = jax.random.normal(k2, (N, D), dtype=jnp.float32)

    avg1 = ema(v1)
    avg2 = ema(v2)
    jax.block_until_ready(avg2)

    # Pure-JAX reference check of the two-step recurrence.
    h_ref = jnp.zeros((N, D), dtype=jnp.float32)
    h_ref = h_ref - (h_ref - v1) * (1.0 - decay)
    a1_ref = h_ref / (1.0 - decay ** 1)
    h_ref = h_ref - (h_ref - v2) * (1.0 - decay)
    a2_ref = h_ref / (1.0 - decay ** 2)

    assert jnp.allclose(avg1, a1_ref, atol=1e-5, rtol=1e-5)
    assert jnp.allclose(avg2, a2_ref, atol=1e-5, rtol=1e-5)
    assert jnp.allclose(ema.hidden, h_ref, atol=1e-5, rtol=1e-5)

    # Exercise the padded (awkward-shape) path: element count not a multiple
    # of 128.
    M = (5, 7)
    decay2 = 0.9
    ema2 = ExponentialMovingAverage(jnp.zeros(M, dtype=jnp.float32), decay2)
    v3 = jax.random.normal(k3, M, dtype=jnp.float32)
    avg3 = ema2(v3)
    jax.block_until_ready(avg3)

    h3_ref = jnp.zeros(M, dtype=jnp.float32)
    h3_ref = h3_ref - (h3_ref - v3) * (1.0 - decay2)
    a3_ref = h3_ref / (1.0 - decay2 ** 1)
    assert jnp.allclose(avg3, a3_ref, atol=1e-5, rtol=1e-5)
    assert jnp.allclose(ema2.hidden, h3_ref, atol=1e-5, rtol=1e-5)

    print("KERNEL_OK")
</pallas_src>

<mosaic_0001>
module attributes {stable_mosaic.version = 11 : i64} {
  func.func @_ema_kernel(%arg0: i32, %arg1: memref<2xf32, #tpu.memory_space<smem>>, %arg2: memref<8x512xf32, #tpu.memory_space<vmem>>, %arg3: memref<8x512xf32, #tpu.memory_space<vmem>>, %arg4: memref<8x512xf32, #tpu.memory_space<vmem>>, %arg5: memref<8x512xf32, #tpu.memory_space<vmem>>) attributes {dimension_semantics = [#tpu.dimension_semantics<parallel>], iteration_bounds = array<i64: 1>, scalar_prefetch = 1 : i64, scratch_operands = 0 : i64, tpu.core_type = #tpu.core_type<tc>, window_params = [{transform_indices = @transform_0, window_bounds = array<i64: 8, 512>}, {transform_indices = @transform_1, window_bounds = array<i64: 8, 512>}, {transform_indices = @transform_2, window_bounds = array<i64: 8, 512>}, {transform_indices = @transform_3, window_bounds = array<i64: 8, 512>}]} {
    %c0 = arith.constant 0 : index
    %0 = memref.load %arg1[%c0] : memref<2xf32, #tpu.memory_space<smem>>
    %c1 = arith.constant 1 : index
    %1 = memref.load %arg1[%c1] : memref<2xf32, #tpu.memory_space<smem>>
    %c0_0 = arith.constant 0 : index
    %c0_1 = arith.constant 0 : index
    %2 = vector.load %arg2[%c0_0, %c0_1] : memref<8x512xf32, #tpu.memory_space<vmem>>, vector<8x512xf32>
    %c0_2 = arith.constant 0 : index
    %c0_3 = arith.constant 0 : index
    %3 = vector.load %arg3[%c0_2, %c0_3] : memref<8x512xf32, #tpu.memory_space<vmem>>, vector<8x512xf32>
    %4 = arith.subf %2, %3 : vector<8x512xf32>
    %5 = vector.broadcast %0 : f32 to vector<8x512xf32>
    %6 = arith.mulf %4, %5 : vector<8x512xf32>
    %7 = arith.subf %2, %6 : vector<8x512xf32>
    %c0_4 = arith.constant 0 : index
    %c0_5 = arith.constant 0 : index
    %8 = vector.load %arg4[%c0_4, %c0_5] : memref<8x512xf32, #tpu.memory_space<vmem>>, vector<8x512xf32>
    tpu.vector_store %arg4[%c0_4, %c0_5], %7 {strides = array<i32>} : memref<8x512xf32, #tpu.memory_space<vmem>>, vector<8x512xf32>,
    %9 = vector.broadcast %1 : f32 to vector<8x512xf32>
    %10 = arith.mulf %7, %9 : vector<8x512xf32>
    %c0_6 = arith.constant 0 : index
    %c0_7 = arith.constant 0 : index
    %11 = vector.load %arg5[%c0_6, %c0_7] : memref<8x512xf32, #tpu.memory_space<vmem>>, vector<8x512xf32>
    tpu.vector_store %arg5[%c0_6, %c0_7], %10 {strides = array<i32>} : memref<8x512xf32, #tpu.memory_space<vmem>>, vector<8x512xf32>,
    return
  }
  func.func @transform_0(%arg0: i32, %arg1: memref<2xf32, #tpu.memory_space<smem>>) -> (i32, i32) {
    %c0_i32 = arith.constant 0 : i32
    %c0_i32_0 = arith.constant 0 : i32
    return %arg0, %c0_i32 : i32, i32
  }
  func.func @transform_1(%arg0: i32, %arg1: memref<2xf32, #tpu.memory_space<smem>>) -> (i32, i32) {
    %c0_i32 = arith.constant 0 : i32
    %c0_i32_0 = arith.constant 0 : i32
    return %arg0, %c0_i32 : i32, i32
  }
  func.func @transform_2(%arg0: i32, %arg1: memref<2xf32, #tpu.memory_space<smem>>) -> (i32, i32) {
    %c0_i32 = arith.constant 0 : i32
    %c0_i32_0 = arith.constant 0 : i32
    return %arg0, %c0_i32 : i32, i32
  }
  func.func @transform_3(%arg0: i32, %arg1: memref<2xf32, #tpu.memory_space<smem>>) -> (i32, i32) {
    %c0_i32 = arith.constant 0 : i32
    %c0_i32_0 = arith.constant 0 : i32
    return %arg0, %c0_i32 : i32, i32
  }
}

</mosaic_0001>

<llo_original>
// kernel: _ema_step.1
$region0: #{_ema_step.1}
  #allocation0 [shape = 'u32[]', space=smem, size = 0x4, offset = 0x4, fixed_abs, tag = 'smem constant byte address 0x4 - core index']
  #allocation1 [shape = 'u32[72,128]{1,0:T(1,128)}', space=vmem, size = 0x9000, scoped, tag = 'internal scratch']
  #allocation2 [shape = 's32[1]{0}', space=sflag, size = 0x4, scoped, tag = 'scoped memory for _ema_step.1']
  #allocation3 [shape = 'u8[512]{0}', space=smem, size = 0x200, scoped, tag = 'prefetched SMEM operand 0']
  %s0 = inlined_call_operand.vmem [shape: f32[2], index: 0, kind: input, shape index: {}]
  %s1 = inlined_call_operand.vmem [shape: f32[8,512], index: 1, kind: input, shape index: {}, may-alias: {1,3}]
  %s2 = inlined_call_operand.vmem [shape: f32[8,512], index: 2, kind: input, shape index: {}]
  %s3 = inlined_call_operand.vmem [shape: f32[8,512], index: 3, kind: output, shape index: {0}, may-alias: {1,3}]
  %s4 = inlined_call_operand.vmem [shape: f32[8,512], index: 4, kind: output, shape index: {1}]
  %5 = xla_tuple %s3, %s4
  %s6 = sld [smem:[#allocation0]]
  $region26: #{_ema_step.1} parent=0
    _
  %s8 = ssub.s32 1, %s6
  %s9 = scalar_select 0, %s8, %s6
  %s11 = sshll.u32 %s0, 4
  %s12 = int_to_ptr.vmem [resolvable:$true] %s11
  %14 = dma.vmem_to_smem %s12, 16, [#allocation3], [#allocation2]
  %16 = dma.done [#allocation2], 16
  %17 = sfence
  // Predicated region
  $region2: #{_ema_step.1} parent=0 // pred_check
    _
  $region3: #{_ema_step.1} parent=0 // pred_check_branch
    %19 = sbr.rel (0) target = $region5
  $region4: #{_ema_step.1} parent=0 // pred_region
    _
  $region5: #{_ema_step.1} parent=0 // pred_fallthru
    _
  // Predicated region
  $region6: #{_ema_step.1} parent=0 // pred_check
    _
  $region7: #{_ema_step.1} parent=0 // pred_check_branch
    %21 = sbr.rel (0) target = $region9
  $region8: #{_ema_step.1} parent=0 // pred_region
    _
  $region9: #{_ema_step.1} parent=0 // pred_fallthru
    _
  %s22 = sld [smem:[#allocation3]]
  %s23 = sld [smem:[#allocation3 + $0x1]]
  %v24 = vld [vmem:[%s1] sm:$0xff]
  %v25 = vld [vmem:[%s1 + $0x8] sm:$0xff]
  %v26 = vld [vmem:[%s1 + $0x10] sm:$0xff]
  %v27 = vld [vmem:[%s1 + $0x18] sm:$0xff]
  %v28 = vld [vmem:[%s2] sm:$0xff]
  %v29 = vld [vmem:[%s2 + $0x8] sm:$0xff]
  %v30 = vld [vmem:[%s2 + $0x10] sm:$0xff]
  %v31 = vld [vmem:[%s2 + $0x18] sm:$0xff]
  %v32 = vsub.f32 %v24, %v28
  %v33 = vsub.f32 %v25, %v29
  %v34 = vsub.f32 %v26, %v30
  %v35 = vsub.f32 %v27, %v31
  %v36 = vstv %s22
  %v37 = vmul.f32 %v32, %v36
  %v38 = vmul.f32 %v33, %v36
  %v39 = vmul.f32 %v34, %v36
  %v40 = vmul.f32 %v35, %v36
  %v41 = vsub.f32 %v24, %v37
  %v42 = vsub.f32 %v25, %v38
  %v43 = vsub.f32 %v26, %v39
  %v44 = vsub.f32 %v27, %v40
  %45 = vst [vmem:[%s3] sm:$0xff] %v41
  %46 = vst [vmem:[%s3 + $0x8] sm:$0xff] %v42
  %47 = vst [vmem:[%s3 + $0x10] sm:$0xff] %v43
  %48 = vst [vmem:[%s3 + $0x18] sm:$0xff] %v44
  %v49 = vstv %s23
  %v50 = vmul.f32 %v41, %v49
  %v51 = vmul.f32 %v42, %v49
  %v52 = vmul.f32 %v43, %v49
  %v53 = vmul.f32 %v44, %v49
  %54 = vst [vmem:[%s4] sm:$0xff] %v50
  %55 = vst [vmem:[%s4 + $0x8] sm:$0xff] %v51
  %56 = vst [vmem:[%s4 + $0x10] sm:$0xff] %v52
  %57 = vst [vmem:[%s4 + $0x18] sm:$0xff] %v53
  // Predicated region
  $region10: #{_ema_step.1} parent=0 // pred_check
    _
  $region11: #{_ema_step.1} parent=0 // pred_check_branch
    %59 = sbr.rel (0) target = $region13
  $region12: #{_ema_step.1} parent=0 // pred_region
    _
  $region13: #{_ema_step.1} parent=0 // pred_fallthru
    _
  // Predicated region
  $region14: #{_ema_step.1} parent=0 // pred_check
    _
  $region15: #{_ema_step.1} parent=0 // pred_check_branch
    %61 = sbr.rel (0) target = $region17
  $region16: #{_ema_step.1} parent=0 // pred_region
    _
  $region17: #{_ema_step.1} parent=0 // pred_fallthru
    _
  // Predicated region
  $region18: #{_ema_step.1} parent=0 // pred_check
    _
  $region19: #{_ema_step.1} parent=0 // pred_check_branch
    %63 = sbr.rel (0) target = $region21
  $region20: #{_ema_step.1} parent=0 // pred_region
    _
  $region21: #{_ema_step.1} parent=0 // pred_fallthru
    _
  // Predicated region
  $region22: #{_ema_step.1} parent=0 // pred_check
    _
  $region23: #{_ema_step.1} parent=0 // pred_check_branch
    %65 = sbr.rel (0) target = $region25
  $region24: #{_ema_step.1} parent=0 // pred_region
    _
  $region25: #{_ema_step.1} parent=0 // pred_fallthru
    _

</llo_original>
